<compile_context>
chip_gen: v5e
topology: v5e:2x2
jax: 0.10.0
libtpu: 0.0.40
codegen_flags: <defaults>
</compile_context>

<pallas_src>
import jax
import jax.numpy as jnp
import numpy as np
from jax.experimental import pallas as pl
from jax.experimental.pallas import tpu as pltpu


# ----------------------------------------------------------------------------
# Direction-fusion helpers (run once in the wrapper, plain XLA)
# ----------------------------------------------------------------------------
def _interleave_gates(a_f, a_r, H):
    """[r,z,n]-ordered last axes of both directions -> [r_f,r_r,z_f,z_r,n_f,n_r]."""
    pieces = []
    for g in range(3):
        pieces.append(a_f[..., g * H:(g + 1) * H])
        pieces.append(a_r[..., g * H:(g + 1) * H])
    return jnp.concatenate(pieces, axis=-1)


def _fuse_blockdiag(wT_f, wT_r, H):
    """Block-diagonal fusion of transposed GRU weights with interleaved gate columns.

    wT_f: (Df, 3H) forward weights (rows = input feats, cols = gates [r,z,n]).
    wT_r: (Dr, 3H) reverse weights.
    Returns (Df+Dr, 6H) so that  [x_f | x_r] @ W  ==  gates in the interleaved layout.
    """
    Df, Dr = wT_f.shape[0], wT_r.shape[0]
    zf = jnp.zeros((Df, H), wT_f.dtype)
    zr = jnp.zeros((Dr, H), wT_r.dtype)
    top = jnp.concatenate(
        [wT_f[:, 0:H], zf, wT_f[:, H:2 * H], zf, wT_f[:, 2 * H:3 * H], zf], axis=1)
    bot = jnp.concatenate(
        [zr, wT_r[:, 0:H], zr, wT_r[:, H:2 * H], zr, wT_r[:, 2 * H:3 * H]], axis=1)
    return jnp.concatenate([top, bot], axis=0)


# ----------------------------------------------------------------------------
# Fused DDNE encoder kernel (all layers, both directions, whole time loop)
# ----------------------------------------------------------------------------
def _make_fused_kernel(T, num_layers, dims):
    """dims = [D_in, H1, H2, ...];  kernel grid = (node_tiles, T)."""
    n_in = 3 + 4 * (num_layers - 1)

    def kernel(*refs):
        in_refs = refs[:n_in]
        out_ref = refs[n_in]
        scratch = refs[n_in + 1:]
        h = scratch[:num_layers]          # per-layer fused hidden state (nb, 2*H_l)
        hist = scratch[num_layers]        # (T, nb, 2*H_last) last-layer fused outputs

        t = pl.program_id(1)

        @pl.when(t == 0)
        def _():
            for l in range(num_layers):
                h[l][...] = jnp.zeros_like(h[l])

        gi1_ref, whh1_ref, bhh1_ref = in_refs[0], in_refs[1], in_refs[2]

        def gru_step(gi, h_prev, whh_ref, bhh_ref, W):
            # W = 2*H (fused width). Layout along last axis: [r | z | n], each W wide,
            # each gate block being [forward(H) | reverse(H)] — matching h_prev's layout.
            gh = jnp.dot(h_prev, whh_ref[...],
                         preferred_element_type=jnp.float32) + bhh_ref[...]
            r = jax.nn.sigmoid(gi[:, :W] + gh[:, :W])
            z = jax.nn.sigmoid(gi[:, W:2 * W] + gh[:, W:2 * W])
            n = jnp.tanh(gi[:, 2 * W:] + r * gh[:, 2 * W:])
            return (1.0 - z) * n + z * h_prev

        # Layer 1: input projection was hoisted outside the recurrence.
        act = gru_step(gi1_ref[...], h[0][...], whh1_ref, bhh1_ref, 2 * dims[1])
        h[0][...] = act

        # Layers 2..L: input is the previous layer's fused output at the same step.
        base = 3
        for l in range(1, num_layers):
            wih_ref, whh_ref, bih_ref, bhh_ref = in_refs[base:base + 4]
            base += 4
            W = 2 * dims[l + 1]
            gi = jnp.dot(act, wih_ref[...],
                         preferred_element_type=jnp.float32) + bih_ref[...]
            act = gru_step(gi, h[l][...], whh_ref, bhh_ref, W)
            h[l][...] = act

        # act == [for_out(t) | rev_out(t)]  (exactly the per-step hstack of the module)
        hist[t] = act

        # Assemble the full embedding once, as a lane-dense block, at the last step.
        @pl.when(t == T - 1)
        def _():
            out_ref[...] = jnp.concatenate([hist[tt] for tt in range(T)], axis=-1)

    return kernel


def ddne_enc_forward(adj_list, for_params, rev_params, node_block=None):
    """adj_list: list of (N, N) dense adjacency matrices.
    for_params / rev_params: per-layer dicts {w_ih (3H,D), w_hh (3H,H), b_ih (3H,), b_hh (3H,)}.
    Returns dyn_emb of shape (N, T * 2 * H_last)."""
    X = jnp.stack([jnp.asarray(a, jnp.float32) for a in adj_list])   # (T, N, D=N)
    T, N, D = X.shape
    num_layers = len(for_params)
    dims = [D] + [int(p["w_hh"].shape[1]) for p in for_params]
    H1, H_last = dims[1], dims[-1]

    if node_block is None:
        node_block = N                     # toy sizes: one node tile
    assert N % node_block == 0
    n_tiles = N // node_block

    # Hoist the layer-1 input projection out of the recurrence: one batched matmul
    # per direction over all T steps, then fold the time reversal + direction fusion
    # into the same precomputed array (no reversed copy read inside the kernel).
    wih1_f = jnp.asarray(for_params[0]["w_ih"], jnp.float32)          # (3H1, D)
    wih1_r = jnp.asarray(rev_params[0]["w_ih"], jnp.float32)
    gi1_f = jnp.einsum("tnd,hd->tnh", X, wih1_f) \
        + jnp.asarray(for_params[0]["b_ih"], jnp.float32)             # (T, N, 3H1)
    gi1_r = jnp.einsum("tnd,hd->tnh", X, wih1_r) \
        + jnp.asarray(rev_params[0]["b_ih"], jnp.float32)
    gi1_r = gi1_r[::-1]                    # reverse GRU step t consumes x[T-1-t]
    gi1_cat = _interleave_gates(gi1_f, gi1_r, H1)                      # (T, N, 6*H1)

    whh1_cat = _fuse_blockdiag(jnp.asarray(for_params[0]["w_hh"], jnp.float32).T,
                               jnp.asarray(rev_params[0]["w_hh"], jnp.float32).T, H1)
    bhh1_cat = _interleave_gates(jnp.asarray(for_params[0]["b_hh"], jnp.float32),
                                 jnp.asarray(rev_params[0]["b_hh"], jnp.float32),
                                 H1).reshape(1, 6 * H1)

    const = lambda i, t: (0, 0)
    inputs = [gi1_cat, whh1_cat, bhh1_cat]
    in_specs = [
        pl.BlockSpec((None, node_block, 6 * H1), lambda i, t: (t, i, 0)),
        pl.BlockSpec((2 * H1, 6 * H1), const),
        pl.BlockSpec((1, 6 * H1), const),
    ]
    for l in range(1, num_layers):
        Din, H = dims[l], dims[l + 1]
        fp, rp = for_params[l], rev_params[l]
        wih_cat = _fuse_blockdiag(jnp.asarray(fp["w_ih"], jnp.float32).T,
                                  jnp.asarray(rp["w_ih"], jnp.float32).T, H)
        whh_cat = _fuse_blockdiag(jnp.asarray(fp["w_hh"], jnp.float32).T,
                                  jnp.asarray(rp["w_hh"], jnp.float32).T, H)
        bih_cat = _interleave_gates(jnp.asarray(fp["b_ih"], jnp.float32),
                                    jnp.asarray(rp["b_ih"], jnp.float32), H).reshape(1, 6 * H)
        bhh_cat = _interleave_gates(jnp.asarray(fp["b_hh"], jnp.float32),
                                    jnp.asarray(rp["b_hh"], jnp.float32), H).reshape(1, 6 * H)
        inputs += [wih_cat, whh_cat, bih_cat, bhh_cat]
        in_specs += [
            pl.BlockSpec((2 * Din, 6 * H), const),
            pl.BlockSpec((2 * H, 6 * H), const),
            pl.BlockSpec((1, 6 * H), const),
            pl.BlockSpec((1, 6 * H), const),
        ]

    scratch_shapes = (
        [pltpu.VMEM((node_block, 2 * dims[l + 1]), jnp.float32) for l in range(num_layers)]
        + [pltpu.VMEM((T, node_block, 2 * H_last), jnp.float32)]
    )

    out = pl.pallas_call(
        _make_fused_kernel(T, num_layers, dims),
        out_shape=jax.ShapeDtypeStruct((N, T * 2 * H_last), jnp.float32),
        grid_spec=pltpu.PrefetchScalarGridSpec(
            num_scalar_prefetch=0,
            grid=(n_tiles, T),
            in_specs=in_specs,
            out_specs=pl.BlockSpec((node_block, T * 2 * H_last), lambda i, t: (i, 0)),
            scratch_shapes=scratch_shapes,
        ),
        compiler_params=pltpu.CompilerParams(
            # node tiles are independent (shardable across cores); time is a recurrence
            dimension_semantics=("parallel", "arbitrary"),
        ),
    )(*inputs)
    return out


# ----------------------------------------------------------------------------
# Pure-JAX reference (for correctness check)
# ----------------------------------------------------------------------------
def gru_layer_ref(x_seq, w_ih, w_hh, b_ih, b_hh):
    T, N, _ = x_seq.shape
    H = w_hh.shape[1]
    wih_t = w_ih.T
    whh_t = w_hh.T

    def step(h, x):
        gi = x @ wih_t + b_ih
        gh = h @ whh_t + b_hh
        i_r, i_z, i_n = gi[:, :H], gi[:, H:2 * H], gi[:, 2 * H:]
        h_r, h_z, h_n = gh[:, :H], gh[:, H:2 * H], gh[:, 2 * H:]
        r = jax.nn.sigmoid(i_r + h_r)
        z = jax.nn.sigmoid(i_z + h_z)
        n = jnp.tanh(i_n + r * h_n)
        h_new = (1.0 - z) * n + z * h
        return h_new, h_new

    h0 = jnp.zeros((N, H), jnp.float32)
    _, outs = jax.lax.scan(step, h0, x_seq)
    return outs


def ddne_enc_ref(adj_list, for_params, rev_params):
    for_out = jnp.stack([jnp.asarray(a, jnp.float32) for a in adj_list])
    rev_out = jnp.stack([jnp.asarray(a, jnp.float32) for a in adj_list[::-1]])
    for l in range(len(for_params)):
        fp, rp = for_params[l], rev_params[l]
        for_out = gru_layer_ref(for_out, fp["w_ih"], fp["w_hh"], fp["b_ih"], fp["b_hh"])
        rev_out = gru_layer_ref(rev_out, rp["w_ih"], rp["w_hh"], rp["b_ih"], rp["b_hh"])
    T = for_out.shape[0]
    per_step = [jnp.concatenate([for_out[t], rev_out[t]], axis=1) for t in range(T)]
    return jnp.concatenate(per_step, axis=1)


# ----------------------------------------------------------------------------
# Deterministic parameter init (PyTorch-like uniform(-1/sqrt(H), 1/sqrt(H)))
# ----------------------------------------------------------------------------
def make_gru_params(key, in_dim, hidden):
    bound = 1.0 / np.sqrt(hidden)
    k1, k2, k3, k4 = jax.random.split(key, 4)
    return {
        "w_ih": jax.random.uniform(k1, (3 * hidden, in_dim), jnp.float32, -bound, bound),
        "w_hh": jax.random.uniform(k2, (3 * hidden, hidden), jnp.float32, -bound, bound),
        "b_ih": jax.random.uniform(k3, (3 * hidden,), jnp.float32, -bound, bound),
        "b_hh": jax.random.uniform(k4, (3 * hidden,), jnp.float32, -bound, bound),
    }


if __name__ == "__main__":
    # Small deterministic setup:
    #   N = 32 nodes (each adjacency matrix is 32x32), T = 4 historical snapshots,
    #   enc_dims = [32, 32, 16] -> two stacked GRU layers per direction.
    #   Final embedding: (32, 4 * 2 * 16) = (32, 128)  (lane-dense output slab).
    key = jax.random.PRNGKey(0)
    N = 32
    T = 4
    enc_dims = [N, 32, 16]
    dropout_rate = 0.2  # unused in forward(), kept for parity with the module signature

    key, *adj_keys = jax.random.split(key, T + 1)
    adj_list = [
        (jax.random.uniform(k, (N, N), jnp.float32) < 0.3).astype(jnp.float32)
        for k in adj_keys
    ]

    for_params, rev_params = [], []
    for l in range(len(enc_dims) - 1):
        key, kf, kr = jax.random.split(key, 3)
        for_params.append(make_gru_params(kf, enc_dims[l], enc_dims[l + 1]))
        rev_params.append(make_gru_params(kr, enc_dims[l], enc_dims[l + 1]))

    dyn_emb = ddne_enc_forward(adj_list, for_params, rev_params)
    dyn_emb = jax.block_until_ready(dyn_emb)

    # Sanity: shape (N, T * 2 * H_last) and matches pure-JAX reference.
    expected_shape = (N, T * 2 * enc_dims[-1])
    assert dyn_emb.shape == expected_shape, (dyn_emb.shape, expected_shape)
    ref = jax.block_until_ready(ddne_enc_ref(adj_list, for_params, rev_params))
    np.testing.assert_allclose(np.asarray(dyn_emb), np.asarray(ref), rtol=1e-5, atol=1e-5)

    print("KERNEL_OK")
</pallas_src>

<mosaic_0001>
module attributes {stable_mosaic.version = 11 : i64} {
  func.func @kernel(%arg0: i32, %arg1: i32, %arg2: memref<1x32x192xf32, #tpu.memory_space<vmem>>, %arg3: memref<64x192xf32, #tpu.memory_space<vmem>>, %arg4: memref<1x192xf32, #tpu.memory_space<vmem>>, %arg5: memref<64x96xf32, #tpu.memory_space<vmem>>, %arg6: memref<32x96xf32, #tpu.memory_space<vmem>>, %arg7: memref<1x96xf32, #tpu.memory_space<vmem>>, %arg8: memref<1x96xf32, #tpu.memory_space<vmem>>, %arg9: memref<32x128xf32, #tpu.memory_space<vmem>>, %arg10: memref<32x64xf32, #tpu.memory_space<vmem>>, %arg11: memref<32x32xf32, #tpu.memory_space<vmem>>, %arg12: memref<4x32x32xf32, #tpu.memory_space<vmem>>) attributes {dimension_semantics = [#tpu.dimension_semantics<parallel>, #tpu.dimension_semantics<arbitrary>], iteration_bounds = array<i64: 1, 4>, scalar_prefetch = 0 : i64, scratch_operands = 3 : i64, tpu.core_type = #tpu.core_type<tc>, window_params = [{transform_indices = @transform_0, window_bounds = array<i64: 1, 32, 192>}, {pipeline_mode = #tpu.pipeline_mode<synchronous>, transform_indices = @transform_1, window_bounds = array<i64: 64, 192>}, {pipeline_mode = #tpu.pipeline_mode<synchronous>, transform_indices = @transform_2, window_bounds = array<i64: 1, 192>}, {pipeline_mode = #tpu.pipeline_mode<synchronous>, transform_indices = @transform_3, window_bounds = array<i64: 64, 96>}, {pipeline_mode = #tpu.pipeline_mode<synchronous>, transform_indices = @transform_4, window_bounds = array<i64: 32, 96>}, {pipeline_mode = #tpu.pipeline_mode<synchronous>, transform_indices = @transform_5, window_bounds = array<i64: 1, 96>}, {pipeline_mode = #tpu.pipeline_mode<synchronous>, transform_indices = @transform_6, window_bounds = array<i64: 1, 96>}, {transform_indices = @transform_7, window_bounds = array<i64: 32, 128>}]} {
    %c0_i32 = arith.constant 0 : i32
    %0 = arith.cmpi eq, %arg1, %c0_i32 : i32
    %1 = arith.extui %0 : i1 to i32
    %c0_i32_0 = arith.constant 0 : i32
    %2 = arith.cmpi ne, %1, %c0_i32_0 : i32
    scf.if %2 {
      %cst_34 = arith.constant 0.000000e+00 : f32
      %83 = vector.broadcast %cst_34 : f32 to vector<32x64xf32>
      %c0_35 = arith.constant 0 : index
      %c0_36 = arith.constant 0 : index
      %84 = vector.load %arg10[%c0_35, %c0_36] : memref<32x64xf32, #tpu.memory_space<vmem>>, vector<32x64xf32>
      tpu.vector_store %arg10[%c0_35, %c0_36], %83 {strides = array<i32>} : memref<32x64xf32, #tpu.memory_space<vmem>>, vector<32x64xf32>,
      %cst_37 = arith.constant 0.000000e+00 : f32
      %85 = vector.broadcast %cst_37 : f32 to vector<32x32xf32>
      %c0_38 = arith.constant 0 : index
      %c0_39 = arith.constant 0 : index
      %86 = vector.load %arg11[%c0_38, %c0_39] : memref<32x32xf32, #tpu.memory_space<vmem>>, vector<32x32xf32>
      tpu.vector_store %arg11[%c0_38, %c0_39], %85 {strides = array<i32>} : memref<32x32xf32, #tpu.memory_space<vmem>>, vector<32x32xf32>,
    } else {
    }
    %c0 = arith.constant 0 : index
    %c0_1 = arith.constant 0 : index
    %c0_2 = arith.constant 0 : index
    %3 = vector.load %arg2[%c0, %c0_1, %c0_2] : memref<1x32x192xf32, #tpu.memory_space<vmem>>, vector<1x32x192xf32>
    %4 = vector.shape_cast %3 : vector<1x32x192xf32> to vector<32x192xf32>
    %c0_3 = arith.constant 0 : index
    %c0_4 = arith.constant 0 : index
    %5 = vector.load %arg10[%c0_3, %c0_4] : memref<32x64xf32, #tpu.memory_space<vmem>>, vector<32x64xf32>
    %c0_5 = arith.constant 0 : index
    %c0_6 = arith.constant 0 : index
    %6 = vector.load %arg3[%c0_5, %c0_6] : memref<64x192xf32, #tpu.memory_space<vmem>>, vector<64x192xf32>
    %cst = arith.constant dense<0.000000e+00> : vector<32x192xf32>
    %7 = tpu.matmul %5, %6, %cst {dimension_numbers = #tpu.dot_dimension_numbers<[1], [0], [0], [1], [0, 0, 1, 1], [], []>} : vector<32x64xf32>, vector<64x192xf32>, vector<32x192xf32> -> vector<32x192xf32>
    %c0_7 = arith.constant 0 : index
    %c0_8 = arith.constant 0 : index
    %8 = vector.load %arg4[%c0_7, %c0_8] : memref<1x192xf32, #tpu.memory_space<vmem>>, vector<1x192xf32>
    %9 = vector.broadcast %8 : vector<1x192xf32> to vector<32x192xf32>
    %10 = arith.addf %7, %9 : vector<32x192xf32>
    %11 = vector.extract_strided_slice %4 {offsets = [0, 0], sizes = [32, 64], strides = [1, 1]} : vector<32x192xf32> to vector<32x64xf32>
    %12 = vector.extract_strided_slice %10 {offsets = [0, 0], sizes = [32, 64], strides = [1, 1]} : vector<32x192xf32> to vector<32x64xf32>
    %13 = arith.addf %11, %12 : vector<32x64xf32>
    %14 = arith.negf %13 : vector<32x64xf32>
    %15 = math.exp %14 : vector<32x64xf32>
    %cst_9 = arith.constant 1.000000e+00 : f32
    %16 = vector.broadcast %cst_9 : f32 to vector<32x64xf32>
    %17 = arith.addf %16, %15 : vector<32x64xf32>
    %18 = arith.divf %16, %17 : vector<32x64xf32>
    %19 = vector.extract_strided_slice %4 {offsets = [0, 64], sizes = [32, 64], strides = [1, 1]} : vector<32x192xf32> to vector<32x64xf32>
    %20 = vector.extract_strided_slice %10 {offsets = [0, 64], sizes = [32, 64], strides = [1, 1]} : vector<32x192xf32> to vector<32x64xf32>
    %21 = arith.addf %19, %20 : vector<32x64xf32>
    %22 = arith.negf %21 : vector<32x64xf32>
    %23 = math.exp %22 : vector<32x64xf32>
    %cst_10 = arith.constant 1.000000e+00 : f32
    %24 = vector.broadcast %cst_10 : f32 to vector<32x64xf32>
    %25 = arith.addf %24, %23 : vector<32x64xf32>
    %26 = arith.divf %24, %25 : vector<32x64xf32>
    %27 = vector.extract_strided_slice %4 {offsets = [0, 128], sizes = [32, 64], strides = [1, 1]} : vector<32x192xf32> to vector<32x64xf32>
    %28 = vector.extract_strided_slice %10 {offsets = [0, 128], sizes = [32, 64], strides = [1, 1]} : vector<32x192xf32> to vector<32x64xf32>
    %29 = arith.mulf %18, %28 : vector<32x64xf32>
    %30 = arith.addf %27, %29 : vector<32x64xf32>
    %31 = math.tanh %30 : vector<32x64xf32>
    %cst_11 = arith.constant 1.000000e+00 : f32
    %32 = vector.broadcast %cst_11 : f32 to vector<32x64xf32>
    %33 = arith.subf %32, %26 : vector<32x64xf32>
    %34 = arith.mulf %33, %31 : vector<32x64xf32>
    %35 = arith.mulf %26, %5 : vector<32x64xf32>
    %36 = arith.addf %34, %35 : vector<32x64xf32>
    %c0_12 = arith.constant 0 : index
    %c0_13 = arith.constant 0 : index
    %37 = vector.load %arg10[%c0_12, %c0_13] : memref<32x64xf32, #tpu.memory_space<vmem>>, vector<32x64xf32>
    tpu.vector_store %arg10[%c0_12, %c0_13], %36 {strides = array<i32>} : memref<32x64xf32, #tpu.memory_space<vmem>>, vector<32x64xf32>,
    %c0_14 = arith.constant 0 : index
    %c0_15 = arith.constant 0 : index
    %38 = vector.load %arg5[%c0_14, %c0_15] : memref<64x96xf32, #tpu.memory_space<vmem>>, vector<64x96xf32>
    %cst_16 = arith.constant dense<0.000000e+00> : vector<32x96xf32>
    %39 = tpu.matmul %36, %38, %cst_16 {dimension_numbers = #tpu.dot_dimension_numbers<[1], [0], [0], [1], [0, 0, 1, 1], [], []>} : vector<32x64xf32>, vector<64x96xf32>, vector<32x96xf32> -> vector<32x96xf32>
    %c0_17 = arith.constant 0 : index
    %c0_18 = arith.constant 0 : index
    %40 = vector.load %arg7[%c0_17, %c0_18] : memref<1x96xf32, #tpu.memory_space<vmem>>, vector<1x96xf32>
    %41 = vector.broadcast %40 : vector<1x96xf32> to vector<32x96xf32>
    %42 = arith.addf %39, %41 : vector<32x96xf32>
    %c0_19 = arith.constant 0 : index
    %c0_20 = arith.constant 0 : index
    %43 = vector.load %arg11[%c0_19, %c0_20] : memref<32x32xf32, #tpu.memory_space<vmem>>, vector<32x32xf32>
    %c0_21 = arith.constant 0 : index
    %c0_22 = arith.constant 0 : index
    %44 = vector.load %arg6[%c0_21, %c0_22] : memref<32x96xf32, #tpu.memory_space<vmem>>, vector<32x96xf32>
    %cst_23 = arith.constant dense<0.000000e+00> : vector<32x96xf32>
    %45 = tpu.matmul %43, %44, %cst_23 {dimension_numbers = #tpu.dot_dimension_numbers<[1], [0], [0], [1], [0, 0, 1, 1], [], []>} : vector<32x32xf32>, vector<32x96xf32>, vector<32x96xf32> -> vector<32x96xf32>
    %c0_24 = arith.constant 0 : index
    %c0_25 = arith.constant 0 : index
    %46 = vector.load %arg8[%c0_24, %c0_25] : memref<1x96xf32, #tpu.memory_space<vmem>>, vector<1x96xf32>
    %47 = vector.broadcast %46 : vector<1x96xf32> to vector<32x96xf32>
    %48 = arith.addf %45, %47 : vector<32x96xf32>
    %49 = vector.extract_strided_slice %42 {offsets = [0, 0], sizes = [32, 32], strides = [1, 1]} : vector<32x96xf32> to vector<32x32xf32>
    %50 = vector.extract_strided_slice %48 {offsets = [0, 0], sizes = [32, 32], strides = [1, 1]} : vector<32x96xf32> to vector<32x32xf32>
    %51 = arith.addf %49, %50 : vector<32x32xf32>
    %52 = arith.negf %51 : vector<32x32xf32>
    %53 = math.exp %52 : vector<32x32xf32>
    %cst_26 = arith.constant 1.000000e+00 : f32
    %54 = vector.broadcast %cst_26 : f32 to vector<32x32xf32>
    %55 = arith.addf %54, %53 : vector<32x32xf32>
    %56 = arith.divf %54, %55 : vector<32x32xf32>
    %57 = vector.extract_strided_slice %42 {offsets = [0, 32], sizes = [32, 32], strides = [1, 1]} : vector<32x96xf32> to vector<32x32xf32>
    %58 = vector.extract_strided_slice %48 {offsets = [0, 32], sizes = [32, 32], strides = [1, 1]} : vector<32x96xf32> to vector<32x32xf32>
    %59 = arith.addf %57, %58 : vector<32x32xf32>
    %60 = arith.negf %59 : vector<32x32xf32>
    %61 = math.exp %60 : vector<32x32xf32>
    %cst_27 = arith.constant 1.000000e+00 : f32
    %62 = vector.broadcast %cst_27 : f32 to vector<32x32xf32>
    %63 = arith.addf %62, %61 : vector<32x32xf32>
    %64 = arith.divf %62, %63 : vector<32x32xf32>
    %65 = vector.extract_strided_slice %42 {offsets = [0, 64], sizes = [32, 32], strides = [1, 1]} : vector<32x96xf32> to vector<32x32xf32>
    %66 = vector.extract_strided_slice %48 {offsets = [0, 64], sizes = [32, 32], strides = [1, 1]} : vector<32x96xf32> to vector<32x32xf32>
    %67 = arith.mulf %56, %66 : vector<32x32xf32>
    %68 = arith.addf %65, %67 : vector<32x32xf32>
    %69 = math.tanh %68 : vector<32x32xf32>
    %cst_28 = arith.constant 1.000000e+00 : f32
    %70 = vector.broadcast %cst_28 : f32 to vector<32x32xf32>
    %71 = arith.subf %70, %64 : vector<32x32xf32>
    %72 = arith.mulf %71, %69 : vector<32x32xf32>
    %73 = arith.mulf %64, %43 : vector<32x32xf32>
    %74 = arith.addf %72, %73 : vector<32x32xf32>
    %c0_29 = arith.constant 0 : index
    %c0_30 = arith.constant 0 : index
    %75 = vector.load %arg11[%c0_29, %c0_30] : memref<32x32xf32, #tpu.memory_space<vmem>>, vector<32x32xf32>
    tpu.vector_store %arg11[%c0_29, %c0_30], %74 {strides = array<i32>} : memref<32x32xf32, #tpu.memory_space<vmem>>, vector<32x32xf32>,
    %76 = arith.index_cast %arg1 : i32 to index
    %c0_31 = arith.constant 0 : index
    %c0_32 = arith.constant 0 : index
    %77 = vector.load %arg12[%76, %c0_31, %c0_32] : memref<4x32x32xf32, #tpu.memory_space<vmem>>, vector<1x32x32xf32>
    %78 = vector.shape_cast %77 : vector<1x32x32xf32> to vector<32x32xf32>
    %79 = vector.shape_cast %74 : vector<32x32xf32> to vector<1x32x32xf32>
    tpu.vector_store %arg12[%76, %c0_31, %c0_32], %79 {strides = array<i32>} : memref<4x32x32xf32, #tpu.memory_space<vmem>>, vector<1x32x32xf32>,
    %c3_i32 = arith.constant 3 : i32
    %80 = arith.cmpi eq, %arg1, %c3_i32 : i32
    %81 = arith.extui %80 : i1 to i32
    %c0_i32_33 = arith.constant 0 : i32
    %82 = arith.cmpi ne, %81, %c0_i32_33 : i32
    scf.if %82 {
      %c0_34 = arith.constant 0 : index
      %c0_35 = arith.constant 0 : index
      %c0_36 = arith.constant 0 : index
      %83 = vector.load %arg12[%c0_34, %c0_35, %c0_36] : memref<4x32x32xf32, #tpu.memory_space<vmem>>, vector<1x32x32xf32>
      %84 = vector.shape_cast %83 : vector<1x32x32xf32> to vector<32x32xf32>
      %c1 = arith.constant 1 : index
      %c0_37 = arith.constant 0 : index
      %c0_38 = arith.constant 0 : index
      %85 = vector.load %arg12[%c1, %c0_37, %c0_38] : memref<4x32x32xf32, #tpu.memory_space<vmem>>, vector<1x32x32xf32>
      %86 = vector.shape_cast %85 : vector<1x32x32xf32> to vector<32x32xf32>
      %c2 = arith.constant 2 : index
      %c0_39 = arith.constant 0 : index
      %c0_40 = arith.constant 0 : index
      %87 = vector.load %arg12[%c2, %c0_39, %c0_40] : memref<4x32x32xf32, #tpu.memory_space<vmem>>, vector<1x32x32xf32>
      %88 = vector.shape_cast %87 : vector<1x32x32xf32> to vector<32x32xf32>
      %c3 = arith.constant 3 : index
      %c0_41 = arith.constant 0 : index
      %c0_42 = arith.constant 0 : index
      %89 = vector.load %arg12[%c3, %c0_41, %c0_42] : memref<4x32x32xf32, #tpu.memory_space<vmem>>, vector<1x32x32xf32>
      %90 = vector.shape_cast %89 : vector<1x32x32xf32> to vector<32x32xf32>
      %91 = tpu.concatenate %84, %86, %88, %90 in 1 : vector<32x32xf32>, vector<32x32xf32>, vector<32x32xf32>, vector<32x32xf32> -> vector<32x128xf32>
      %c0_43 = arith.constant 0 : index
      %c0_44 = arith.constant 0 : index
      %92 = vector.load %arg9[%c0_43, %c0_44] : memref<32x128xf32, #tpu.memory_space<vmem>>, vector<32x128xf32>
      tpu.vector_store %arg9[%c0_43, %c0_44], %91 {strides = array<i32>} : memref<32x128xf32, #tpu.memory_space<vmem>>, vector<32x128xf32>,
    } else {
    }
    return
  }
  func.func @transform_0(%arg0: i32, %arg1: i32) -> (i32, i32, i32) {
    %c0_i32 = arith.constant 0 : i32
    %c0_i32_0 = arith.constant 0 : i32
    return %arg1, %arg0, %c0_i32 : i32, i32, i32
  }
  func.func @transform_1(%arg0: i32, %arg1: i32) -> (i32, i32) {
    %c0_i32 = arith.constant 0 : i32
    %c0_i32_0 = arith.constant 0 : i32
    %c0_i32_1 = arith.constant 0 : i32
    return %c0_i32, %c0_i32_0 : i32, i32
  }
  func.func @transform_2(%arg0: i32, %arg1: i32) -> (i32, i32) {
    %c0_i32 = arith.constant 0 : i32
    %c0_i32_0 = arith.constant 0 : i32
    %c0_i32_1 = arith.constant 0 : i32
    return %c0_i32, %c0_i32_0 : i32, i32
  }
  func.func @transform_3(%arg0: i32, %arg1: i32) -> (i32, i32) {
    %c0_i32 = arith.constant 0 : i32
    %c0_i32_0 = arith.constant 0 : i32
    %c0_i32_1 = arith.constant 0 : i32
    return %c0_i32, %c0_i32_0 : i32, i32
  }
  func.func @transform_4(%arg0: i32, %arg1: i32) -> (i32, i32) {
    %c0_i32 = arith.constant 0 : i32
    %c0_i32_0 = arith.constant 0 : i32
    %c0_i32_1 = arith.constant 0 : i32
    return %c0_i32, %c0_i32_0 : i32, i32
  }
  func.func @transform_5(%arg0: i32, %arg1: i32) -> (i32, i32) {
    %c0_i32 = arith.constant 0 : i32
    %c0_i32_0 = arith.constant 0 : i32
    %c0_i32_1 = arith.constant 0 : i32
    return %c0_i32, %c0_i32_0 : i32, i32
  }
  func.func @transform_6(%arg0: i32, %arg1: i32) -> (i32, i32) {
    %c0_i32 = arith.constant 0 : i32
    %c0_i32_0 = arith.constant 0 : i32
    %c0_i32_1 = arith.constant 0 : i32
    return %c0_i32, %c0_i32_0 : i32, i32
  }
  func.func @transform_7(%arg0: i32, %arg1: i32) -> (i32, i32) {
    %c0_i32 = arith.constant 0 : i32
    %c0_i32_0 = arith.constant 0 : i32
    return %arg0, %c0_i32 : i32, i32
  }
}

</mosaic_0001>

<llo_original>
// kernel: tpu_custom_call.1
$region0: #{tpu_custom_call.1}
  #allocation0 [shape = 'u32[]', space=smem, size = 0x4, offset = 0x4, fixed_abs, tag = 'smem constant byte address 0x4 - core index']
  #allocation1 [shape = 'u32[72,128]{1,0:T(1,128)}', space=vmem, size = 0x9000, scoped, tag = 'internal scratch']
  #allocation2 [shape = 'f32[32,64]{1,0:T(8,128)}', space=vmem, size = 0x4000, scoped, tag = 'scratch operand']
  #allocation3 [shape = 'f32[32,32]{1,0:T(8,128)}', space=vmem, size = 0x4000, scoped, tag = 'scratch operand']
  #allocation4 [shape = 'f32[4,32,32]{2,1,0:T(8,128)}', space=vmem, size = 0x10000, scoped, tag = 'scratch operand']
  %s0 = inlined_call_operand.hbm [shape: f32[4,32,192], index: 0, kind: input, shape index: {}]
  %s1 = inlined_call_operand.hbm [shape: f32[64,192], index: 1, kind: input, shape index: {}]
  %s2 = inlined_call_operand.hbm [shape: f32[1,192], index: 2, kind: input, shape index: {}]
  %s3 = inlined_call_operand.hbm [shape: f32[64,96], index: 3, kind: input, shape index: {}]
  %s4 = inlined_call_operand.hbm [shape: f32[32,96], index: 4, kind: input, shape index: {}]
  %s5 = inlined_call_operand.vmem [shape: f32[1,96], index: 5, kind: input, shape index: {}]
  %s6 = inlined_call_operand.vmem [shape: f32[1,96], index: 6, kind: input, shape index: {}]
  %s7 = inlined_call_operand.hbm [shape: f32[32,128], index: 7, kind: output, shape index: {}]
  %s8 = sld [smem:[#allocation0]]
  $region89: #{tpu_custom_call.1} parent=0
    _
  %s10 = ssub.s32 1, %s8
  %s11 = scalar_select 0, %s10, %s8
  $region1: #{tpu_custom_call.1} parent=0
    #allocation5 [shape = 'u8[65536]{0}', space=vmem, size = 0x10000, scoped, tag = 'input window, operand 0']
    #allocation6 [shape = 's32[2]{0}', space=sflag, size = 0x8, scoped, tag = 'scoped memory for tpu_custom_call.1']
    #allocation7 [shape = 's32[2]{0}', space=sflag, size = 0x8, scoped, tag = 'scoped memory for tpu_custom_call.1']
    #allocation8 [shape = 'u8[65536]{0}', space=vmem, size = 0x10000, scoped, tag = 'input window, operand 1, single buffered']
    #allocation9 [shape = 's32[1]{0}', space=sflag, size = 0x4, scoped, tag = 'scoped memory for tpu_custom_call.1']
    #allocation10 [shape = 'u8[1024]{0}', space=vmem, size = 0x400, scoped, tag = 'input window, operand 2, single buffered']
    #allocation11 [shape = 'u8[32768]{0}', space=vmem, size = 0x8000, scoped, tag = 'input window, operand 3, single buffered']
    #allocation12 [shape = 's32[1]{0}', space=sflag, size = 0x4, scoped, tag = 'scoped memory for tpu_custom_call.1']
    #allocation13 [shape = 'u8[16384]{0}', space=vmem, size = 0x4000, scoped, tag = 'input window, operand 4, single buffered']
    #allocation14 [shape = 'u8[16384]{0}', space=vmem, size = 0x4000, scoped, tag = 'output window, operand 0, single buffered']
    %12 = vsyncpa [#allocation6], 0
    %s13 = scalar_lea.sflag [#allocation6], 1
    %14 = vsyncpa %s13, 0
    %15 = vsyncpa [#allocation9], 0
    %16 = vsyncpa [#allocation12], 0
    %17 = vsyncpa [#allocation7], 0
    loop: start=0, step=1, limit=6
    $region2: #{tpu_custom_call.1} parent=1 // loop_pre_header
      _
    $region3: #{tpu_custom_call.1} parent=1 // loop_header
      %s19 = sphi 0, %s23
      %p20 = scmp.ge.s32.totalorder %s19, 6
      %s26 = sphi 0, %s38
      %s27 = sphi 0, %s34
      %s28 = sphi 0, %s26
      %s29 = sphi 0, %s27
      %s30 = sphi 0, %s28
      %s31 = sphi 0, %s29
      %s43 = sphi 0, %s45
      %s46 = sphi 0, %s43
      %s47 = sphi 0, %s46
      %s63 = sphi 0, %s47
      %s67 = sphi 0, %s67
      %s69 = sphi 0, %s67
      %s70 = sphi 0, %s69
      %s84 = sphi 0, %s70
      %s88 = sphi 0, %s88
      %s90 = sphi 0, %s88
      %s91 = sphi 0, %s90
      %s105 = sphi 0, %s91
      %s109 = sphi 0, %s109
      %s111 = sphi 0, %s109
      %s112 = sphi 0, %s111
      %s126 = sphi 0, %s112
      %s130 = sphi 0, %s130
      %s132 = sphi 0, %s130
      %s133 = sphi 0, %s132
      %s147 = sphi 0, %s133
      %s151 = sphi 0, %s151
      %s153 = sphi 0, %s151
      %s154 = sphi 0, %s153
      %s168 = sphi 0, %s154
      %s172 = sphi 0, %s172
      %s174 = sphi 0, %s172
      %s175 = sphi 0, %s174
      %s189 = sphi 0, %s175
      %s195 = sphi 0, %s197
      %s198 = sphi 0, %s195
      %s199 = sphi 0, %s198
      %s215 = sphi 0, %s199
    $region4: #{tpu_custom_call.1} parent=1 // loop_header_branch
      %22 = sbr.rel (%p20) target = $region8
    $region5: #{tpu_custom_call.1} parent=1 // loop_body
      %s24 = ssub.s32 %s19, 1
      %s25 = ssub.s32 %s19, 2
      %s32 = sadd.s32 1, %s27
      %p33 = scmp.ge.s32.totalorder %s32, 4
      %s34 = scalar_select %p33, 0, %s32
      %s35 = sadd.s32 1, %s26
      %s36 = scalar_select %p33, %s35, %s26
      %p37 = scmp.ge.s32.totalorder %s36, 1
      %s38 = scalar_select %p37, 0, %s36
      %s39 = ssub.s32 %s27, %s34
      %s40 = ssub.s32 %s26, %s38
      %s41 = sor.u32 %s39, %s40
      %p42 = scmp.eq.s32.totalorder %s41, 0
      %s44 = sadd.s32 %s43, 1
      %s45 = scalar_select %p42, %s43, %s44
      %p48 = pneg %p42
      %p49 = scmp.eq.s32.totalorder %s19, 3
      %p50 = por %p48, %p49
      %p51 = scmp.ne.s32.totalorder %s43, %s46
      %p52 = scmp.eq.s32.totalorder %s19, 0
      %p53 = por %p51, %p52
      %p54 = scmp.ne.s32.totalorder %s43, %s46
      %p55 = scmp.eq.s32.totalorder %s24, 3
      %p56 = por %p54, %p55
      %p57 = scmp.ne.s32.totalorder %s46, %s47
      %p58 = scmp.eq.s32.totalorder %s24, 0
      %p59 = por %p57, %p58
      %p60 = scmp.ne.s32.totalorder %s46, %s47
      %p61 = scmp.eq.s32.totalorder %s25, 3
      %p62 = por %p60, %p61
      %p64 = scmp.ne.s32.totalorder %s47, %s63
      %p65 = scmp.eq.s32.totalorder %s25, 0
      %p66 = por %p64, %p65
      %s68 = sadd.s32 %s67, 1
      %p71 = scmp.eq.s32.totalorder %s19, 3
      %p72 = scmp.ne.s32.totalorder %s67, %s69
      %p73 = scmp.eq.s32.totalorder %s19, 0
      %p74 = por %p72, %p73
      %p75 = scmp.ne.s32.totalorder %s67, %s69
      %p76 = scmp.eq.s32.totalorder %s24, 3
      %p77 = por %p75, %p76
      %p78 = scmp.ne.s32.totalorder %s69, %s70
      %p79 = scmp.eq.s32.totalorder %s24, 0
      %p80 = por %p78, %p79
      %p81 = scmp.ne.s32.totalorder %s69, %s70
      %p82 = scmp.eq.s32.totalorder %s25, 3
      %p83 = por %p81, %p82
      %p85 = scmp.ne.s32.totalorder %s70, %s84
      %p86 = scmp.eq.s32.totalorder %s25, 0
      %p87 = por %p85, %p86
      %s89 = sadd.s32 %s88, 1
      %p92 = scmp.eq.s32.totalorder %s19, 3
      %p93 = scmp.ne.s32.totalorder %s88, %s90
      %p94 = scmp.eq.s32.totalorder %s19, 0
      %p95 = por %p93, %p94
      %p96 = scmp.ne.s32.totalorder %s88, %s90
      %p97 = scmp.eq.s32.totalorder %s24, 3
      %p98 = por %p96, %p97
      %p99 = scmp.ne.s32.totalorder %s90, %s91
      %p100 = scmp.eq.s32.totalorder %s24, 0
      %p101 = por %p99, %p100
      %p102 = scmp.ne.s32.totalorder %s90, %s91
      %p103 = scmp.eq.s32.totalorder %s25, 3
      %p104 = por %p102, %p103
      %p106 = scmp.ne.s32.totalorder %s91, %s105
      %p107 = scmp.eq.s32.totalorder %s25, 0
      %p108 = por %p106, %p107
      %s110 = sadd.s32 %s109, 1
      %p113 = scmp.eq.s32.totalorder %s19, 3
      %p114 = scmp.ne.s32.totalorder %s109, %s111
      %p115 = scmp.eq.s32.totalorder %s19, 0
      %p116 = por %p114, %p115
      %p117 = scmp.ne.s32.totalorder %s109, %s111
      %p118 = scmp.eq.s32.totalorder %s24, 3
      %p119 = por %p117, %p118
      %p120 = scmp.ne.s32.totalorder %s111, %s112
      %p121 = scmp.eq.s32.totalorder %s24, 0
      %p122 = por %p120, %p121
      %p123 = scmp.ne.s32.totalorder %s111, %s112
      %p124 = scmp.eq.s32.totalorder %s25, 3
      %p125 = por %p123, %p124
      %p127 = scmp.ne.s32.totalorder %s112, %s126
      %p128 = scmp.eq.s32.totalorder %s25, 0
      %p129 = por %p127, %p128
      %s131 = sadd.s32 %s130, 1
      %p134 = scmp.eq.s32.totalorder %s19, 3
      %p135 = scmp.ne.s32.totalorder %s130, %s132
      %p136 = scmp.eq.s32.totalorder %s19, 0
      %p137 = por %p135, %p136
      %p138 = scmp.ne.s32.totalorder %s130, %s132
      %p139 = scmp.eq.s32.totalorder %s24, 3
      %p140 = por %p138, %p139
      %p141 = scmp.ne.s32.totalorder %s132, %s133
      %p142 = scmp.eq.s32.totalorder %s24, 0
      %p143 = por %p141, %p142
      %p144 = scmp.ne.s32.totalorder %s132, %s133
      %p145 = scmp.eq.s32.totalorder %s25, 3
      %p146 = por %p144, %p145
      %p148 = scmp.ne.s32.totalorder %s133, %s147
      %p149 = scmp.eq.s32.totalorder %s25, 0
      %p150 = por %p148, %p149
      %s152 = sadd.s32 %s151, 1
      %p155 = scmp.eq.s32.totalorder %s19, 3
      %p156 = scmp.ne.s32.totalorder %s151, %s153
      %p157 = scmp.eq.s32.totalorder %s19, 0
      %p158 = por %p156, %p157
      %p159 = scmp.ne.s32.totalorder %s151, %s153
      %p160 = scmp.eq.s32.totalorder %s24, 3
      %p161 = por %p159, %p160
      %p162 = scmp.ne.s32.totalorder %s153, %s154
      %p163 = scmp.eq.s32.totalorder %s24, 0
      %p164 = por %p162, %p163
      %p165 = scmp.ne.s32.totalorder %s153, %s154
      %p166 = scmp.eq.s32.totalorder %s25, 3
      %p167 = por %p165, %p166
      %p169 = scmp.ne.s32.totalorder %s154, %s168
      %p170 = scmp.eq.s32.totalorder %s25, 0
      %p171 = por %p169, %p170
      %s173 = sadd.s32 %s172, 1
      %p176 = scmp.eq.s32.totalorder %s19, 3
      %p177 = scmp.ne.s32.totalorder %s172, %s174
      %p178 = scmp.eq.s32.totalorder %s19, 0
      %p179 = por %p177, %p178
      %p180 = scmp.ne.s32.totalorder %s172, %s174
      %p181 = scmp.eq.s32.totalorder %s24, 3
      %p182 = por %p180, %p181
      %p183 = scmp.ne.s32.totalorder %s174, %s175
      %p184 = scmp.eq.s32.totalorder %s24, 0
      %p185 = por %p183, %p184
      %p186 = scmp.ne.s32.totalorder %s174, %s175
      %p187 = scmp.eq.s32.totalorder %s25, 3
      %p188 = por %p186, %p187
      %p190 = scmp.ne.s32.totalorder %s175, %s189
      %p191 = scmp.eq.s32.totalorder %s25, 0
      %p192 = por %p190, %p191
      %s193 = ssub.s32 %s26, %s38
      %p194 = scmp.eq.s32.totalorder %s193, 0
      %s196 = sadd.s32 %s195, 1
      %s197 = scalar_select %p194, %s195, %s196
      %p200 = pneg %p194
      %p201 = scmp.eq.s32.totalorder %s19, 3
      %p202 = por %p200, %p201
      %p203 = scmp.ne.s32.totalorder %s195, %s198
      %p204 = scmp.eq.s32.totalorder %s19, 0
      %p205 = por %p203, %p204
      %p206 = scmp.ne.s32.totalorder %s195, %s198
      %p207 = scmp.eq.s32.totalorder %s24, 3
      %p208 = por %p206, %p207
      %p209 = scmp.ne.s32.totalorder %s198, %s199
      %p210 = scmp.eq.s32.totalorder %s24, 0
      %p211 = por %p209, %p210
      %p212 = scmp.ne.s32.totalorder %s198, %s199
      %p213 = scmp.eq.s32.totalorder %s25, 3
      %p214 = por %p212, %p213
      %p216 = scmp.ne.s32.totalorder %s199, %s215
      %p217 = scmp.eq.s32.totalorder %s25, 0
      %p218 = por %p216, %p217
      %p219 = scmp.le.s32.totalorder 1, %s19
      %p220 = scmp.lt.s32.totalorder %s19, 5
      %p221 = pnand %p219, %p220
      %p222 = pneg %p221
      // Predicated region
      $region9: #{tpu_custom_call.1} parent=5 // pred_check
        _
      $region10: #{tpu_custom_call.1} parent=5 // pred_check_branch
        %224 = sbr.rel (%p221) target = $region12
      $region11: #{tpu_custom_call.1} parent=5 // pred_region
        %s225 = ssub.s32 %s19, 1
        // Predicated region
        $region13: #{tpu_custom_call.1} parent=11 // pred_check
          %p226 = pneg %p80
        $region14: #{tpu_custom_call.1} parent=11 // pred_check_branch
          %228 = sbr.rel (%p226) target = $region16
        $region15: #{tpu_custom_call.1} parent=11 // pred_region
          %230 = vsyncadd [#allocation9], 0
          %s231 = sshll.u32 %s1, 4
          %s232 = int_to_ptr.hbm [resolvable:$true] %s231
          %s233 = sshll.u32 [#allocation8], 4
          %s234 = int_to_ptr.vmem [resolvable:$true] %s233
          %239 = dma.hbm_to_vmem [thread:$0]  %s232, 2048, %s234, [#allocation9], 256, 256, 16
        $region16: #{tpu_custom_call.1} parent=11 // pred_fallthru
          _
        // Predicated region
        $region17: #{tpu_custom_call.1} parent=11 // pred_check
          %p240 = pneg %p101
        $region18: #{tpu_custom_call.1} parent=11 // pred_check_branch
          %242 = sbr.rel (%p240) target = $region20
        $region19: #{tpu_custom_call.1} parent=11 // pred_region
          %244 = vsyncadd [#allocation9], 0
          %s246 = sshll.u32 %s2, 4
          %s247 = int_to_ptr.hbm [resolvable:$true] %s246
          %s248 = sshll.u32 [#allocation10], 4
          %s249 = int_to_ptr.vmem [resolvable:$true] %s248
          %251 = dma.hbm_to_vmem [thread:$0]  %s247, 32, %s249, [#allocation9]
        $region20: #{tpu_custom_call.1} parent=11 // pred_fallthru
          _
        // Predicated region
        $region21: #{tpu_custom_call.1} parent=11 // pred_check
          %p252 = pneg %p122
        $region22: #{tpu_custom_call.1} parent=11 // pred_check_branch
          %254 = sbr.rel (%p252) target = $region24
        $region23: #{tpu_custom_call.1} parent=11 // pred_region
          %256 = vsyncadd [#allocation12], 0
          %s257 = sshll.u32 %s3, 4
          %s258 = int_to_ptr.hbm [resolvable:$true] %s257
          %s259 = sshll.u32 [#allocation11], 4
          %s260 = int_to_ptr.vmem [resolvable:$true] %s259
          %265 = dma.hbm_to_vmem [thread:$0]  %s258, 1024, %s260, [#allocation12], 128, 128, 8
        $region24: #{tpu_custom_call.1} parent=11 // pred_fallthru
          _
        // Predicated region
        $region25: #{tpu_custom_call.1} parent=11 // pred_check
          %p266 = pneg %p143
        $region26: #{tpu_custom_call.1} parent=11 // pred_check_branch
          %268 = sbr.rel (%p266) target = $region28
        $region27: #{tpu_custom_call.1} parent=11 // pred_region
          %270 = vsyncadd [#allocation12], 0
          %s271 = sshll.u32 %s4, 4
          %s272 = int_to_ptr.hbm [resolvable:$true] %s271
          %s273 = sshll.u32 [#allocation13], 4
          %s274 = int_to_ptr.vmem [resolvable:$true] %s273
          %279 = dma.hbm_to_vmem [thread:$0]  %s272, 512, %s274, [#allocation12], 128, 128, 8
        $region28: #{tpu_custom_call.1} parent=11 // pred_fallthru
          _
        // Predicated region
        $region29: #{tpu_custom_call.1} parent=11 // pred_check
          %p280 = pneg %p164
        $region30: #{tpu_custom_call.1} parent=11 // pred_check_branch
          %282 = sbr.rel (%p280) target = $region32
        $region31: #{tpu_custom_call.1} parent=11 // pred_region
          _
        $region32: #{tpu_custom_call.1} parent=11 // pred_fallthru
          _
        // Predicated region
        $region33: #{tpu_custom_call.1} parent=11 // pred_check
          %p283 = pneg %p185
        $region34: #{tpu_custom_call.1} parent=11 // pred_check_branch
          %285 = sbr.rel (%p283) target = $region36
        $region35: #{tpu_custom_call.1} parent=11 // pred_region
          _
        $region36: #{tpu_custom_call.1} parent=11 // pred_fallthru
          _
      $region12: #{tpu_custom_call.1} parent=5 // pred_fallthru
        _
      %p286 = scmp.lt.s32.totalorder %s19, 4
      // Predicated region
      $region37: #{tpu_custom_call.1} parent=5 // pred_check
        %p287 = pneg %p286
      $region38: #{tpu_custom_call.1} parent=5 // pred_check_branch
        %289 = sbr.rel (%p287) target = $region40
      $region39: #{tpu_custom_call.1} parent=5 // pred_region
        // Predicated region
        $region41: #{tpu_custom_call.1} parent=39 // pred_check
          %p290 = pneg %p53
        $region42: #{tpu_custom_call.1} parent=39 // pred_check_branch
          %292 = sbr.rel (%p290) target = $region44
        $region43: #{tpu_custom_call.1} parent=39 // pred_region
          %s293 = sand.u32 %s43, 1
          %s294 = scalar_lea.sflag [#allocation6], %s293
          %s295 = sand.u32 %s43, 1
          %s296 = smul.addr %s295, 64
          %s297 = scalar_lea.vmem [#allocation5], %s296
          %s298 = smul.u32 4, %s26
          %300 = vsyncadd %s294, 0
          %s301 = smul.addr %s298, 2
          %s302 = smul.addr %s27, 8
          %s303 = sadd.s32 %s301, %s302
          %s304 = smul.addr %s303, 8
          %s305 = scalar_lea.hbm %s0, %s304
          %s306 = sshll.u32 %s305, 4
          %s307 = int_to_ptr.hbm [resolvable:$true] %s306
          %s308 = sshll.u32 %s297, 4
          %s309 = int_to_ptr.vmem [resolvable:$true] %s308
          %314 = dma.hbm_to_vmem [thread:$0]  %s307, 1024, %s309, %s294, 256, 256, 16
        $region44: #{tpu_custom_call.1} parent=39 // pred_fallthru
          _
      $region40: #{tpu_custom_call.1} parent=5 // pred_fallthru
        _
      %p315 = scmp.le.s32.totalorder 1, %s19
      %p316 = scmp.lt.s32.totalorder %s19, 5
      %p317 = pnand %p315, %p316
      %p318 = pneg %p317
      // Predicated region
      $region45: #{tpu_custom_call.1} parent=5 // pred_check
        _
      $region46: #{tpu_custom_call.1} parent=5 // pred_check_branch
        %320 = sbr.rel (%p317) target = $region48
      $region47: #{tpu_custom_call.1} parent=5 // pred_region
        %s321 = ssub.s32 %s19, 1
        %s322 = sand.u32 %s46, 1
        %s323 = scalar_lea.sflag [#allocation6], %s322
        %s324 = sand.u32 %s46, 1
        %s325 = smul.addr %s324, 64
        %s326 = scalar_lea.vmem [#allocation5], %s325
        // Predicated region
        $region49: #{tpu_custom_call.1} parent=47 // pred_check
          %p327 = pneg %p59
        $region50: #{tpu_custom_call.1} parent=47 // pred_check_branch
          %329 = sbr.rel (%p327) target = $region52
        $region51: #{tpu_custom_call.1} parent=47 // pred_region
          %331 = dma.done %s323, 1024
        $region52: #{tpu_custom_call.1} parent=47 // pred_fallthru
          _
        // Predicated region
        $region53: #{tpu_custom_call.1} parent=47 // pred_check
          %p332 = pneg %p80
        $region54: #{tpu_custom_call.1} parent=47 // pred_check_branch
          %334 = sbr.rel (%p332) target = $region56
        $region55: #{tpu_custom_call.1} parent=47 // pred_region
          %336 = dma.done [#allocation9], 2048
        $region56: #{tpu_custom_call.1} parent=47 // pred_fallthru
          _
        // Predicated region
        $region57: #{tpu_custom_call.1} parent=47 // pred_check
          %p337 = pneg %p101
        $region58: #{tpu_custom_call.1} parent=47 // pred_check_branch
          %339 = sbr.rel (%p337) target = $region60
        $region59: #{tpu_custom_call.1} parent=47 // pred_region
          %341 = dma.done [#allocation9], 32
        $region60: #{tpu_custom_call.1} parent=47 // pred_fallthru
          _
        // Predicated region
        $region61: #{tpu_custom_call.1} parent=47 // pred_check
          %p342 = pneg %p122
        $region62: #{tpu_custom_call.1} parent=47 // pred_check_branch
          %344 = sbr.rel (%p342) target = $region64
        $region63: #{tpu_custom_call.1} parent=47 // pred_region
          %346 = dma.done [#allocation12], 1024
        $region64: #{tpu_custom_call.1} parent=47 // pred_fallthru
          _
        // Predicated region
        $region65: #{tpu_custom_call.1} parent=47 // pred_check
          %p347 = pneg %p143
        $region66: #{tpu_custom_call.1} parent=47 // pred_check_branch
          %349 = sbr.rel (%p347) target = $region68
        $region67: #{tpu_custom_call.1} parent=47 // pred_region
          %351 = dma.done [#allocation12], 512
        $region68: #{tpu_custom_call.1} parent=47 // pred_fallthru
          _
        %s352 = sand.u32 %s46, 1
        %s353 = scalar_lea.sflag [#allocation6], %s352
        %s354 = sand.u32 %s46, 1
        %s355 = smul.addr %s354, 64
        %s356 = scalar_lea.vmem [#allocation5], %s355
        %p357 = pneg %p59
        %p358 = pneg %p56
        %p359 = pneg %p80
        %p360 = pneg %p77
        %p361 = pneg %p101
        %p362 = pneg %p98
        %p363 = pneg %p122
        %p364 = pneg %p119
        %p365 = pneg %p143
        %p366 = pneg %p140
        %p367 = pneg %p164
        %p368 = pneg %p161
        %p369 = pneg %p185
        %p370 = pneg %p182
        %p371 = pneg %p211
        %p372 = pneg %p208
        %s373 = smul.u32 4, %s28
        %s374 = smul.u32 4, %s28
        %p375 = scmp.eq.s32.totalorder %s29, 0
        // Predicated region
        $region69: #{tpu_custom_call.1} parent=47 // pred_check
          %p376 = pneg %p375
        $region70: #{tpu_custom_call.1} parent=47 // pred_check_branch
          %378 = sbr.rel (%p376) target = $region72
        $region71: #{tpu_custom_call.1} parent=47 // pred_region
          %vm379 = vcmask 523264
          %380 = vst.msk [vmem:[#allocation2] sm:$0xff] %vm379, 0.0
          %381 = vst.msk [vmem:[#allocation2 + $0x8] sm:$0xff] %vm379, 0.0
          %382 = vst.msk [vmem:[#allocation2 + $0x10] sm:$0xff] %vm379, 0.0
          %383 = vst.msk [vmem:[#allocation2 + $0x18] sm:$0xff] %vm379, 0.0
          %vm384 = vcmask 261120
          %385 = vst.msk [vmem:[#allocation3] sm:$0xff] %vm384, 0.0
          %386 = vst.msk [vmem:[#allocation3 + $0x8] sm:$0xff] %vm384, 0.0
          %387 = vst.msk [vmem:[#allocation3 + $0x10] sm:$0xff] %vm384, 0.0
          %388 = vst.msk [vmem:[#allocation3 + $0x18] sm:$0xff] %vm384, 0.0
        $region72: #{tpu_custom_call.1} parent=47 // pred_fallthru
          _
        %v389 = vld [vmem:[%s326] sm:$0xff]
        %v390 = vld [vmem:[%s326 + $0x8] sm:$0xff]
        %v391 = vld [vmem:[%s326 + $0x10] sm:$0xff]
        %v392 = vld [vmem:[%s326 + $0x18] sm:$0xff]
        %v393 = vld [vmem:[%s326 + $0x20] sm:$0xff]
        %v394 = vld [vmem:[%s326 + $0x28] sm:$0xff]
        %v395 = vld [vmem:[%s326 + $0x30] sm:$0xff]
        %v396 = vld [vmem:[%s326 + $0x38] sm:$0xff]
        %v397 = vld [vmem:[#allocation2] sm:$0xff]
        %v398 = vld [vmem:[#allocation2 + $0x8] sm:$0xff]
        %v399 = vld [vmem:[#allocation2 + $0x10] sm:$0xff]
        %v400 = vld [vmem:[#allocation2 + $0x18] sm:$0xff]
        %v401 = vld [vmem:[#allocation8] sm:$0xff]
        %v402 = vld [vmem:[#allocation8 + $0x8] sm:$0xff]
        %v403 = vld [vmem:[#allocation8 + $0x10] sm:$0xff]
        %v404 = vld [vmem:[#allocation8 + $0x18] sm:$0xff]
        %v405 = vld [vmem:[#allocation8 + $0x20] sm:$0xff]
        %v406 = vld [vmem:[#allocation8 + $0x28] sm:$0xff]
        %v407 = vld [vmem:[#allocation8 + $0x30] sm:$0xff]
        %v408 = vld [vmem:[#allocation8 + $0x38] sm:$0xff]
        %v409 = vld [vmem:[#allocation8 + $0x40] sm:$0xff]
        %v410 = vld [vmem:[#allocation8 + $0x48] sm:$0xff]
        %v411 = vld [vmem:[#allocation8 + $0x50] sm:$0xff]
        %v412 = vld [vmem:[#allocation8 + $0x58] sm:$0xff]
        %v413 = vld [vmem:[#allocation8 + $0x60] sm:$0xff]
        %v414 = vld [vmem:[#allocation8 + $0x68] sm:$0xff]
        %v415 = vld [vmem:[#allocation8 + $0x70] sm:$0xff]
        %v416 = vld [vmem:[#allocation8 + $0x78] sm:$0xff]
        %v417 = vld [vmem:[#allocation10] sm:$0x3]
        %v419 = vperm.slane %v417, 0
        %v420 = vperm.slane %v417, 1
        %vm423 = vcmask 523264
        %v425 = vsel %vm423, %v397, 0
        %v428 = vsel %vm423, %v398, 0
        %v431 = vsel %vm423, %v399, 0
        %v434 = vsel %vm423, %v400, 0
        %436 = vmatpush.msra.mxu0 0.0
        %437 = vmatpush.msra.mxu0 0.0
        %438 = vmatpush.msra.mxu0 0.0
        %439 = vmatpush.msra.mxu0 0.0
        %440 = vmatpush.msra.mxu0 0.0
        %441 = vmatpush.msra.mxu0 0.0
        %442 = vmatpush.msra.mxu0 0.0
        %443 = vmatpush.msra.mxu0 0.0
        %444 = vmatpush.msra.mxu0 %v415
        %445 = vmatpush.msra.mxu0 %v413
        %446 = vmatpush.msra.mxu0 %v411
        %447 = vmatpush.msra.mxu0 %v409
        %448 = vmatpush.msra.mxu0 %v407
        %449 = vmatpush.msra.mxu0 %v405
        %450 = vmatpush.msra.mxu0 %v403
        %451 = vmatpush.msra.mxu0 %v401
        %452 = vmatmul.f32.gmra.mxu0 %v425
        %v453 = vpop.f32.mrf.mxu0
        %v454 = vadd.f32 %v419, %v453
        %455 = vmatmul.f32.gmra.mxu0 %v428
        %v456 = vpop.f32.mrf.mxu0
        %v457 = vadd.f32 %v419, %v456
        %458 = vmatmul.f32.gmra.mxu0 %v431
        %v459 = vpop.f32.mrf.mxu0
        %v460 = vadd.f32 %v419, %v459
        %461 = vmatmul.f32.gmra.mxu0 %v434
        %v462 = vpop.f32.mrf.mxu0
        %v463 = vadd.f32 %v419, %v462
        %464 = vdwg.mxu0
        %465 = vmatpush.msra.mxu0 0.0
        %466 = vmatpush.msra.mxu0 0.0
        %467 = vmatpush.msra.mxu0 0.0
        %468 = vmatpush.msra.mxu0 0.0
        %469 = vmatpush.msra.mxu0 0.0
        %470 = vmatpush.msra.mxu0 0.0
        %471 = vmatpush.msra.mxu0 0.0
        %472 = vmatpush.msra.mxu0 0.0
        %473 = vmatpush.msra.mxu0 %v416
        %474 = vmatpush.msra.mxu0 %v414
        %475 = vmatpush.msra.mxu0 %v412
        %476 = vmatpush.msra.mxu0 %v410
        %477 = vmatpush.msra.mxu0 %v408
        %478 = vmatpush.msra.mxu0 %v406
        %479 = vmatpush.msra.mxu0 %v404
        %480 = vmatpush.msra.mxu0 %v402
        %481 = vmatmul.f32.gmra.mxu0 %v425
        %v482 = vpop.f32.mrf.mxu0
        %v483 = vadd.f32 %v420, %v482
        %484 = vmatmul.f32.gmra.mxu0 %v428
        %v485 = vpop.f32.mrf.mxu0
        %v486 = vadd.f32 %v420, %v485
        %487 = vmatmul.f32.gmra.mxu0 %v431
        %v488 = vpop.f32.mrf.mxu0
        %v489 = vadd.f32 %v420, %v488
        %490 = vmatmul.f32.gmra.mxu0 %v434
        %v491 = vpop.f32.mrf.mxu0
        %v492 = vadd.f32 %v420, %v491
        %493 = vdwg.mxu0
        %v494 = vadd.f32 %v389, %v454
        %v495 = vadd.f32 %v391, %v457
        %v496 = vadd.f32 %v393, %v460
        %v497 = vadd.f32 %v395, %v463
        %v498 = vxor.u32 %v494, 2147483648
        %v499 = vxor.u32 %v495, 2147483648
        %v500 = vxor.u32 %v496, 2147483648
        %v501 = vxor.u32 %v497, 2147483648
        %v502 = vmul.f32 %v498, 1.442695
        %v503 = vpow.pop %v502
        %v504 = vmul.f32 %v499, 1.442695
        %v505 = vpow.pop %v504
        %v506 = vmul.f32 %v500, 1.442695
        %v507 = vpow.pop %v506
        %v508 = vmul.f32 %v501, 1.442695
        %v509 = vpow.pop %v508
        %v510 = vadd.f32 %v503, 1.0
        %v511 = vadd.f32 %v505, 1.0
        %v512 = vadd.f32 %v507, 1.0
        %v513 = vadd.f32 %v509, 1.0
        %v514 = vrcp.pop %v510
        %v515 = vmul.f32 %v510, %v514
        %v516 = vsub.f32 1.0, %v515
        %v517 = vmul.f32 %v514, %v516
        %v518 = vadd.f32 %v514, %v517
        %vm519 = vweird.f32 %v510
        %vm520 = vweird.f32 %v514
        %vm521 = vmor %vm519, %vm520
        %v522 = vsel %vm521, %v514, %v518
        %v523 = vand.u32 2147483647, %v510
        %vm524 = vcmp.eq.f32.partialorder %v523, 8.507059e+37
        %v525 = vand.u32 %v510, 2147483648
        %v526 = vor.u32 1.1754944e-38, %v525
        %v527 = vsel %vm524, %v526, %v522
        %v528 = vmul.f32 1.0, %v527
        %v529 = vrcp.pop %v511
        %v530 = vmul.f32 %v511, %v529
        %v531 = vsub.f32 1.0, %v530
        %v532 = vmul.f32 %v529, %v531
        %v533 = vadd.f32 %v529, %v532
        %vm534 = vweird.f32 %v511
        %vm535 = vweird.f32 %v529
        %vm536 = vmor %vm534, %vm535
        %v537 = vsel %vm536, %v529, %v533
        %v538 = vand.u32 2147483647, %v511
        %vm539 = vcmp.eq.f32.partialorder %v538, 8.507059e+37
        %v540 = vand.u32 %v511, 2147483648
        %v541 = vor.u32 1.1754944e-38, %v540
        %v542 = vsel %vm539, %v541, %v537
        %v543 = vmul.f32 1.0, %v542
        %v544 = vrcp.pop %v512
        %v545 = vmul.f32 %v512, %v544
        %v546 = vsub.f32 1.0, %v545
        %v547 = vmul.f32 %v544, %v546
        %v548 = vadd.f32 %v544, %v547
        %vm549 = vweird.f32 %v512
        %vm550 = vweird.f32 %v544
        %vm551 = vmor %vm549, %vm550
        %v552 = vsel %vm551, %v544, %v548
        %v553 = vand.u32 2147483647, %v512
        %vm554 = vcmp.eq.f32.partialorder %v553, 8.507059e+37
        %v555 = vand.u32 %v512, 2147483648
        %v556 = vor.u32 1.1754944e-38, %v555
        %v557 = vsel %vm554, %v556, %v552
        %v558 = vmul.f32 1.0, %v557
        %v559 = vrcp.pop %v513
        %v560 = vmul.f32 %v513, %v559
        %v561 = vsub.f32 1.0, %v560
        %v562 = vmul.f32 %v559, %v561
        %v563 = vadd.f32 %v559, %v562
        %vm564 = vweird.f32 %v513
        %vm565 = vweird.f32 %v559
        %vm566 = vmor %vm564, %vm565
        %v567 = vsel %vm566, %v559, %v563
        %v568 = vand.u32 2147483647, %v513
        %vm569 = vcmp.eq.f32.partialorder %v568, 8.507059e+37
        %v570 = vand.u32 %v513, 2147483648
        %v571 = vor.u32 1.1754944e-38, %v570
        %v572 = vsel %vm569, %v571, %v567
        %v573 = vmul.f32 1.0, %v572
        %v574 = vmul.f32 %v528, %v483
        %v575 = vmul.f32 %v543, %v486
        %v576 = vmul.f32 %v558, %v489
        %v577 = vmul.f32 %v573, %v492
        %v578 = vadd.f32 %v390, %v574
        %v579 = vadd.f32 %v392, %v575
        %v580 = vadd.f32 %v394, %v576
        %v581 = vadd.f32 %v396, %v577
        %v582 = vtanh.pop %v578
        %v583 = vtanh.pop %v579
        %v584 = vtanh.pop %v580
        %v585 = vtanh.pop %v581
        %v586 = vsub.f32 1.0, %v528
        %v587 = vsub.f32 1.0, %v543
        %v588 = vsub.f32 1.0, %v558
        %v589 = vsub.f32 1.0, %v573
        %594 = vrot.lane.b32.xlu0 %v582, 64
        %v595 = vpop.permute.xlu0 %594
        %596 = vrot.lane.b32.xlu0 %v583, 64
        %v597 = vpop.permute.xlu0 %596
        %598 = vrot.lane.b32.xlu0 %v584, 64
        %v599 = vpop.permute.xlu0 %598
        %600 = vrot.lane.b32.xlu0 %v585, 64
        %v601 = vpop.permute.xlu0 %600
        %v606 = vmul.f32 %v586, %v595
        %v607 = vmul.f32 %v587, %v597
        %v608 = vmul.f32 %v588, %v599
        %v609 = vmul.f32 %v589, %v601
        %610 = vrot.lane.b32.xlu0 %v397, 64
        %v611 = vpop.permute.xlu0 %610
        %612 = vrot.lane.b32.xlu0 %v398, 64
        %v613 = vpop.permute.xlu0 %612
        %614 = vrot.lane.b32.xlu0 %v399, 64
        %v615 = vpop.permute.xlu0 %614
        %616 = vrot.lane.b32.xlu0 %v400, 64
        %v617 = vpop.permute.xlu0 %616
        %v622 = vmul.f32 %v528, %v611
        %v623 = vmul.f32 %v543, %v613
        %v624 = vmul.f32 %v558, %v615
        %v625 = vmul.f32 %v573, %v617
        %v626 = vadd.f32 %v606, %v622
        %v627 = vadd.f32 %v607, %v623
        %v628 = vadd.f32 %v608, %v624
        %v629 = vadd.f32 %v609, %v625
        %634 = vrot.lane.b32.xlu0 %v626, 64
        %v635 = vpop.permute.xlu0 %634
        %636 = vrot.lane.b32.xlu0 %v627, 64
        %v637 = vpop.permute.xlu0 %636
        %638 = vrot.lane.b32.xlu0 %v628, 64
        %v639 = vpop.permute.xlu0 %638
        %640 = vrot.lane.b32.xlu0 %v629, 64
        %v641 = vpop.permute.xlu0 %640
        %646 = vst.msk [vmem:[#allocation2] sm:$0xff] %vm423, %v635
        %647 = vst.msk [vmem:[#allocation2 + $0x8] sm:$0xff] %vm423, %v637
        %648 = vst.msk [vmem:[#allocation2 + $0x10] sm:$0xff] %vm423, %v639
        %649 = vst.msk [vmem:[#allocation2 + $0x18] sm:$0xff] %vm423, %v641
        %v650 = vld [vmem:[#allocation11] sm:$0xff]
        %v651 = vld [vmem:[#allocation11 + $0x8] sm:$0xff]
        %v652 = vld [vmem:[#allocation11 + $0x10] sm:$0xff]
        %v653 = vld [vmem:[#allocation11 + $0x18] sm:$0xff]
        %v654 = vld [vmem:[#allocation11 + $0x20] sm:$0xff]
        %v655 = vld [vmem:[#allocation11 + $0x28] sm:$0xff]
        %v656 = vld [vmem:[#allocation11 + $0x30] sm:$0xff]
        %v657 = vld [vmem:[#allocation11 + $0x38] sm:$0xff]
        %v658 = vld [vmem:[%s5] sm:$0x1]
        %v660 = vperm.slane %v658, 0
        %v662 = vsel %vm423, %v635, 0
        %v664 = vsel %vm423, %v637, 0
        %v666 = vsel %vm423, %v639, 0
        %v668 = vsel %vm423, %v641, 0
        %670 = vmatpush.msra.mxu0 0.0
        %671 = vmatpush.msra.mxu0 0.0
        %672 = vmatpush.msra.mxu0 0.0
        %673 = vmatpush.msra.mxu0 0.0
        %674 = vmatpush.msra.mxu0 0.0
        %675 = vmatpush.msra.mxu0 0.0
        %676 = vmatpush.msra.mxu0 0.0
        %677 = vmatpush.msra.mxu0 0.0
        %678 = vmatpush.msra.mxu0 %v657
        %679 = vmatpush.msra.mxu0 %v656
        %680 = vmatpush.msra.mxu0 %v655
        %681 = vmatpush.msra.mxu0 %v654
        %682 = vmatpush.msra.mxu0 %v653
        %683 = vmatpush.msra.mxu0 %v652
        %684 = vmatpush.msra.mxu0 %v651
        %685 = vmatpush.msra.mxu0 %v650
        %686 = vmatmul.f32.gmra.mxu0 %v662
        %v687 = vpop.f32.mrf.mxu0
        %v688 = vadd.f32 %v660, %v687
        %689 = vmatmul.f32.gmra.mxu0 %v664
        %v690 = vpop.f32.mrf.mxu0
        %v691 = vadd.f32 %v660, %v690
        %692 = vmatmul.f32.gmra.mxu0 %v666
        %v693 = vpop.f32.mrf.mxu0
        %v694 = vadd.f32 %v660, %v693
        %695 = vmatmul.f32.gmra.mxu0 %v668
        %v696 = vpop.f32.mrf.mxu0
        %v697 = vadd.f32 %v660, %v696
        %698 = vdwg.mxu0
        %v699 = vld [vmem:[#allocation3] sm:$0xff]
        %v700 = vld [vmem:[#allocation3 + $0x8] sm:$0xff]
        %v701 = vld [vmem:[#allocation3 + $0x10] sm:$0xff]
        %v702 = vld [vmem:[#allocation3 + $0x18] sm:$0xff]
        %v703 = vld [vmem:[#allocation13] sm:$0xff]
        %v704 = vld [vmem:[#allocation13 + $0x8] sm:$0xff]
        %v705 = vld [vmem:[#allocation13 + $0x10] sm:$0xff]
        %v706 = vld [vmem:[#allocation13 + $0x18] sm:$0xff]
        %v707 = vld [vmem:[%s6] sm:$0x1]
        %v709 = vperm.slane %v707, 0
        %vm711 = vcmask 261120
        %v713 = vsel %vm711, %v699, 0
        %v716 = vsel %vm711, %v700, 0
        %v719 = vsel %vm711, %v701, 0
        %v722 = vsel %vm711, %v702, 0
        %724 = vmatpush.msra.mxu0 0.0
        %725 = vmatpush.msra.mxu0 0.0
        %726 = vmatpush.msra.mxu0 0.0
        %727 = vmatpush.msra.mxu0 0.0
        %728 = vmatpush.msra.mxu0 0.0
        %729 = vmatpush.msra.mxu0 0.0
        %730 = vmatpush.msra.mxu0 0.0
        %731 = vmatpush.msra.mxu0 0.0
        %732 = vmatpush.msra.mxu0 0.0
        %733 = vmatpush.msra.mxu0 0.0
        %734 = vmatpush.msra.mxu0 0.0
        %735 = vmatpush.msra.mxu0 0.0
        %736 = vmatpush.msra.mxu0 %v706
        %737 = vmatpush.msra.mxu0 %v705
        %738 = vmatpush.msra.mxu0 %v704
        %739 = vmatpush.msra.mxu0 %v703
        %740 = vmatmul.f32.gmra.mxu0 %v713
        %v741 = vpop.f32.mrf.mxu0
        %v742 = vadd.f32 %v709, %v741
        %743 = vmatmul.f32.gmra.mxu0 %v716
        %v744 = vpop.f32.mrf.mxu0
        %v745 = vadd.f32 %v709, %v744
        %746 = vmatmul.f32.gmra.mxu0 %v719
        %v747 = vpop.f32.mrf.mxu0
        %v748 = vadd.f32 %v709, %v747
        %749 = vmatmul.f32.gmra.mxu0 %v722
        %v750 = vpop.f32.mrf.mxu0
        %v751 = vadd.f32 %v709, %v750
        %752 = vdwg.mxu0
        %v753 = vadd.f32 %v688, %v742
        %v754 = vadd.f32 %v691, %v745
        %v755 = vadd.f32 %v694, %v748
        %v756 = vadd.f32 %v697, %v751
        %v757 = vxor.u32 %v753, 2147483648
        %v758 = vxor.u32 %v754, 2147483648
        %v759 = vxor.u32 %v755, 2147483648
        %v760 = vxor.u32 %v756, 2147483648
        %v761 = vmul.f32 %v757, 1.442695
        %v762 = vpow.pop %v761
        %v763 = vmul.f32 %v758, 1.442695
        %v764 = vpow.pop %v763
        %v765 = vmul.f32 %v759, 1.442695
        %v766 = vpow.pop %v765
        %v767 = vmul.f32 %v760, 1.442695
        %v768 = vpow.pop %v767
        %v769 = vadd.f32 %v762, 1.0
        %v770 = vadd.f32 %v764, 1.0
        %v771 = vadd.f32 %v766, 1.0
        %v772 = vadd.f32 %v768, 1.0
        %v773 = vrcp.pop %v769
        %v774 = vmul.f32 %v769, %v773
        %v775 = vsub.f32 1.0, %v774
        %v776 = vmul.f32 %v773, %v775
        %v777 = vadd.f32 %v773, %v776
        %vm778 = vweird.f32 %v769
        %vm779 = vweird.f32 %v773
        %vm780 = vmor %vm778, %vm779
        %v781 = vsel %vm780, %v773, %v777
        %v782 = vand.u32 2147483647, %v769
        %vm783 = vcmp.eq.f32.partialorder %v782, 8.507059e+37
        %v784 = vand.u32 %v769, 2147483648
        %v785 = vor.u32 1.1754944e-38, %v784
        %v786 = vsel %vm783, %v785, %v781
        %v787 = vmul.f32 1.0, %v786
        %v788 = vrcp.pop %v770
        %v789 = vmul.f32 %v770, %v788
        %v790 = vsub.f32 1.0, %v789
        %v791 = vmul.f32 %v788, %v790
        %v792 = vadd.f32 %v788, %v791
        %vm793 = vweird.f32 %v770
        %vm794 = vweird.f32 %v788
        %vm795 = vmor %vm793, %vm794
        %v796 = vsel %vm795, %v788, %v792
        %v797 = vand.u32 2147483647, %v770
        %vm798 = vcmp.eq.f32.partialorder %v797, 8.507059e+37
        %v799 = vand.u32 %v770, 2147483648
        %v800 = vor.u32 1.1754944e-38, %v799
        %v801 = vsel %vm798, %v800, %v796
        %v802 = vmul.f32 1.0, %v801
        %v803 = vrcp.pop %v771
        %v804 = vmul.f32 %v771, %v803
        %v805 = vsub.f32 1.0, %v804
        %v806 = vmul.f32 %v803, %v805
        %v807 = vadd.f32 %v803, %v806
        %vm808 = vweird.f32 %v771
        %vm809 = vweird.f32 %v803
        %vm810 = vmor %vm808, %vm809
        %v811 = vsel %vm810, %v803, %v807
        %v812 = vand.u32 2147483647, %v771
        %vm813 = vcmp.eq.f32.partialorder %v812, 8.507059e+37
        %v814 = vand.u32 %v771, 2147483648
        %v815 = vor.u32 1.1754944e-38, %v814
        %v816 = vsel %vm813, %v815, %v811
        %v817 = vmul.f32 1.0, %v816
        %v818 = vrcp.pop %v772
        %v819 = vmul.f32 %v772, %v818
        %v820 = vsub.f32 1.0, %v819
        %v821 = vmul.f32 %v818, %v820
        %v822 = vadd.f32 %v818, %v821
        %vm823 = vweird.f32 %v772
        %vm824 = vweird.f32 %v818
        %vm825 = vmor %vm823, %vm824
        %v826 = vsel %vm825, %v818, %v822
        %v827 = vand.u32 2147483647, %v772
        %vm828 = vcmp.eq.f32.partialorder %v827, 8.507059e+37
        %v829 = vand.u32 %v772, 2147483648
        %v830 = vor.u32 1.1754944e-38, %v829
        %v831 = vsel %vm828, %v830, %v826
        %v832 = vmul.f32 1.0, %v831
        %837 = vrot.lane.b32.xlu0 %v742, 64
        %v838 = vpop.permute.xlu0 %837
        %839 = vrot.lane.b32.xlu0 %v745, 64
        %v840 = vpop.permute.xlu0 %839
        %841 = vrot.lane.b32.xlu0 %v748, 64
        %v842 = vpop.permute.xlu0 %841
        %843 = vrot.lane.b32.xlu0 %v751, 64
        %v844 = vpop.permute.xlu0 %843
        %v849 = vmul.f32 %v787, %v838
        %v850 = vmul.f32 %v802, %v840
        %v851 = vmul.f32 %v817, %v842
        %v852 = vmul.f32 %v832, %v844
        %857 = vrot.lane.b32.xlu0 %v849, 64
        %v858 = vpop.permute.xlu0 %857
        %859 = vrot.lane.b32.xlu0 %v850, 64
        %v860 = vpop.permute.xlu0 %859
        %861 = vrot.lane.b32.xlu0 %v851, 64
        %v862 = vpop.permute.xlu0 %861
        %863 = vrot.lane.b32.xlu0 %v852, 64
        %v864 = vpop.permute.xlu0 %863
        %v869 = vadd.f32 %v688, %v858
        %v870 = vadd.f32 %v691, %v860
        %v871 = vadd.f32 %v694, %v862
        %v872 = vadd.f32 %v697, %v864
        %v873 = vtanh.pop %v869
        %v874 = vtanh.pop %v870
        %v875 = vtanh.pop %v871
        %v876 = vtanh.pop %v872
        %v877 = vsub.f32 1.0, %v787
        %v878 = vsub.f32 1.0, %v802
        %v879 = vsub.f32 1.0, %v817
        %v880 = vsub.f32 1.0, %v832
        %885 = vrot.lane.b32.xlu0 %v873, 96
        %v886 = vpop.permute.xlu0 %885
        %887 = vrot.lane.b32.xlu0 %v874, 96
        %v888 = vpop.permute.xlu0 %887
        %889 = vrot.lane.b32.xlu0 %v875, 96
        %v890 = vpop.permute.xlu0 %889
        %891 = vrot.lane.b32.xlu0 %v876, 96
        %v892 = vpop.permute.xlu0 %891
        %v897 = vmul.f32 %v877, %v886
        %v898 = vmul.f32 %v878, %v888
        %v899 = vmul.f32 %v879, %v890
        %v900 = vmul.f32 %v880, %v892
        %901 = vrot.lane.b32.xlu0 %v699, 32
        %v902 = vpop.permute.xlu0 %901
        %903 = vrot.lane.b32.xlu0 %v700, 32
        %v904 = vpop.permute.xlu0 %903
        %905 = vrot.lane.b32.xlu0 %v701, 32
        %v906 = vpop.permute.xlu0 %905
        %907 = vrot.lane.b32.xlu0 %v702, 32
        %v908 = vpop.permute.xlu0 %907
        %v913 = vmul.f32 %v787, %v902
        %v914 = vmul.f32 %v802, %v904
        %v915 = vmul.f32 %v817, %v906
        %v916 = vmul.f32 %v832, %v908
        %v917 = vadd.f32 %v897, %v913
        %v918 = vadd.f32 %v898, %v914
        %v919 = vadd.f32 %v899, %v915
        %v920 = vadd.f32 %v900, %v916
        %925 = vrot.lane.b32.xlu0 %v917, 96
        %v926 = vpop.permute.xlu0 %925
        %927 = vrot.lane.b32.xlu0 %v918, 96
        %v928 = vpop.permute.xlu0 %927
        %929 = vrot.lane.b32.xlu0 %v919, 96
        %v930 = vpop.permute.xlu0 %929
        %931 = vrot.lane.b32.xlu0 %v920, 96
        %v932 = vpop.permute.xlu0 %931
        %937 = vst.msk [vmem:[#allocation3] sm:$0xff] %vm711, %v926
        %938 = vst.msk [vmem:[#allocation3 + $0x8] sm:$0xff] %vm711, %v928
        %939 = vst.msk [vmem:[#allocation3 + $0x10] sm:$0xff] %vm711, %v930
        %940 = vst.msk [vmem:[#allocation3 + $0x18] sm:$0xff] %vm711, %v932
        %s941 = smul.u32 %s29, 32
        %s942 = scalar_lea.vmem [#allocation4], %s941
        %943 = vst.msk [vmem:[%s942] sm:$0xff] %vm711, %v926
        %944 = vst.msk [vmem:[%s942 + $0x8] sm:$0xff] %vm711, %v928
        %945 = vst.msk [vmem:[%s942 + $0x10] sm:$0xff] %vm711, %v930
        %946 = vst.msk [vmem:[%s942 + $0x18] sm:$0xff] %vm711, %v932
        %p947 = scmp.eq.s32.totalorder %s29, 3
        // Predicated region
        $region73: #{tpu_custom_call.1} parent=47 // pred_check
          %p948 = pneg %p947
        $region74: #{tpu_custom_call.1} parent=47 // pred_check_branch
          %950 = sbr.rel (%p948) target = $region76
        $region75: #{tpu_custom_call.1} parent=47 // pred_region
          %v951 = vld [vmem:[#allocation4] sm:$0xff]
          %v952 = vld [vmem:[#allocation4 + $0x8] sm:$0xff]
          %v953 = vld [vmem:[#allocation4 + $0x10] sm:$0xff]
          %v954 = vld [vmem:[#allocation4 + $0x18] sm:$0xff]
          %s955 = scalar_lea.vmem [#allocation4], 32
          %v956 = vld [vmem:[%s955] sm:$0xff]
          %v957 = vld [vmem:[%s955 + $0x8] sm:$0xff]
          %v958 = vld [vmem:[%s955 + $0x10] sm:$0xff]
          %v959 = vld [vmem:[%s955 + $0x18] sm:$0xff]
          %s960 = scalar_lea.vmem [#allocation4], 64
          %v961 = vld [vmem:[%s960] sm:$0xff]
          %v962 = vld [vmem:[%s960 + $0x8] sm:$0xff]
          %v963 = vld [vmem:[%s960 + $0x10] sm:$0xff]
          %v964 = vld [vmem:[%s960 + $0x18] sm:$0xff]
          %s965 = scalar_lea.vmem [#allocation4], 96
          %v966 = vld [vmem:[%s965] sm:$0xff]
          %v967 = vld [vmem:[%s965 + $0x8] sm:$0xff]
          %v968 = vld [vmem:[%s965 + $0x10] sm:$0xff]
          %v969 = vld [vmem:[%s965 + $0x18] sm:$0xff]
          %974 = vrot.lane.b32.xlu0 %v956, 32
          %v975 = vpop.permute.xlu0 %974
          %976 = vrot.lane.b32.xlu0 %v957, 32
          %v977 = vpop.permute.xlu0 %976
          %978 = vrot.lane.b32.xlu0 %v958, 32
          %v979 = vpop.permute.xlu0 %978
          %980 = vrot.lane.b32.xlu0 %v959, 32
          %v981 = vpop.permute.xlu0 %980
          %990 = vrot.lane.b32.xlu0 %v961, 64
          %v991 = vpop.permute.xlu0 %990
          %992 = vrot.lane.b32.xlu0 %v962, 64
          %v993 = vpop.permute.xlu0 %992
          %994 = vrot.lane.b32.xlu0 %v963, 64
          %v995 = vpop.permute.xlu0 %994
          %996 = vrot.lane.b32.xlu0 %v964, 64
          %v997 = vpop.permute.xlu0 %996
          %1006 = vrot.lane.b32.xlu0 %v966, 96
          %v1007 = vpop.permute.xlu0 %1006
          %1008 = vrot.lane.b32.xlu0 %v967, 96
          %v1009 = vpop.permute.xlu0 %1008
          %1010 = vrot.lane.b32.xlu0 %v968, 96
          %v1011 = vpop.permute.xlu0 %1010
          %1012 = vrot.lane.b32.xlu0 %v969, 96
          %v1013 = vpop.permute.xlu0 %1012
          %v1018 = vsel %vm711, %v951, %v975
          %v1019 = vsel %vm711, %v952, %v977
          %v1020 = vsel %vm711, %v953, %v979
          %v1021 = vsel %vm711, %v954, %v981
          %v1022 = vsel %vm423, %v1018, %v991
          %v1023 = vsel %vm423, %v1019, %v993
          %v1024 = vsel %vm423, %v1020, %v995
          %v1025 = vsel %vm423, %v1021, %v997
          %vm1026 = vcmask 785408
          %v1027 = vsel %vm1026, %v1022, %v1007
          %v1028 = vsel %vm1026, %v1023, %v1009
          %v1029 = vsel %vm1026, %v1024, %v1011
          %v1030 = vsel %vm1026, %v1025, %v1013
          %1031 = vst [vmem:[#allocation14] sm:$0xff] %v1027
          %1032 = vst [vmem:[#allocation14 + $0x8] sm:$0xff] %v1028
          %1033 = vst [vmem:[#allocation14 + $0x10] sm:$0xff] %v1029
          %1034 = vst [vmem:[#allocation14 + $0x18] sm:$0xff] %v1030
        $region76: #{tpu_custom_call.1} parent=47 // pred_fallthru
          _
        // Predicated region
        $region77: #{tpu_custom_call.1} parent=47 // pred_check
          %p1035 = pneg %p208
        $region78: #{tpu_custom_call.1} parent=47 // pred_check_branch
          %1037 = sbr.rel (%p1035) target = $region80
        $region79: #{tpu_custom_call.1} parent=47 // pred_region
          %s1038 = smul.u32 4, %s28
          %1040 = vsyncadd [#allocation7], 0
          %s1041 = smul.addr %s1038, 8
          %s1042 = scalar_lea.hbm %s7, %s1041
          %s1043 = sshll.u32 [#allocation14], 4
          %s1044 = int_to_ptr.vmem [resolvable:$true] %s1043
          %s1045 = sshll.u32 %s1042, 4
          %s1046 = int_to_ptr.hbm [resolvable:$true] %s1045
          %1051 = dma.vmem_to_hbm [thread:$0]  %s1044, 512, %s1046, [#allocation7], 128, 128, 8
        $region80: #{tpu_custom_call.1} parent=47 // pred_fallthru
          _
        // Predicated region
        $region81: #{tpu_custom_call.1} parent=47 // pred_check
          %p1052 = pneg %p208
        $region82: #{tpu_custom_call.1} parent=47 // pred_check_branch
          %1054 = sbr.rel (%p1052) target = $region84
        $region83: #{tpu_custom_call.1} parent=47 // pred_region
          %1056 = dma.done [#allocation7], 512
        $region84: #{tpu_custom_call.1} parent=47 // pred_fallthru
          _
      $region48: #{tpu_custom_call.1} parent=5 // pred_fallthru
        _
      %p1057 = scmp.le.s32.totalorder 2, %s19
      // Predicated region
      $region85: #{tpu_custom_call.1} parent=5 // pred_check
        %p1058 = pneg %p1057
      $region86: #{tpu_custom_call.1} parent=5 // pred_check_branch
        %1060 = sbr.rel (%p1058) target = $region88
      $region87: #{tpu_custom_call.1} parent=5 // pred_region
        %s1061 = ssub.s32 %s19, 2
      $region88: #{tpu_custom_call.1} parent=5 // pred_fallthru
        _
    $region6: #{tpu_custom_call.1} parent=1 // loop_footer
      %s23 = sadd.s32 1, %s19
    $region7: #{tpu_custom_call.1} parent=1 // loop_footer_branch
      %18 = sbr.rel target = $region3
    $region8: #{tpu_custom_call.1} parent=1 // loop_exit
      _
    %1062 = vsyncpa [#allocation6], 1
    %s1063 = scalar_lea.sflag [#allocation6], 1
    %1064 = vsyncpa %s1063, 1
    %1065 = vsyncpa [#allocation9], 1
    %1066 = vsyncpa [#allocation12], 1
    %1067 = vsyncpa [#allocation7], 1
    %s1068 = scalar_lea.sflag [#allocation7], 1
    %1069 = vsyncpa %s1068, 1

</llo_original>
